<compile_context>
chip_gen: v7x
topology: tpu7x:2x2x1
jax: 0.10.0
libtpu: 0.0.40
codegen_flags: <defaults>
</compile_context>

<pallas_src>
import jax
import jax.numpy as jnp
from jax.experimental import pallas as pl
from jax.experimental.pallas import tpu as pltpu

_SUBLANE = 8    # f32 sublane width
_LANE = 128     # lane width


def _round_up(n, m):
    return (n + m - 1) // m * m


def _round_down(n, m):
    return n // m * m


def _critic_kernel(x_ref, w1_ref, b1_ref, w2r_ref, b2_ref, out_ref):
    # x:   (TM, S)    w1: (S, 16)   b1: (1, 16)
    # w2r: (1, 16)    b2: (1, 1)    out: (TM, 1)
    x = x_ref[...]
    # fc1 + ReLU: MXU matmul with f32 accumulation (MXU has massive slack in
    # this HBM-bound kernel; keeping it off the VPU is fine on all gens).
    h = jnp.dot(x, w1_ref[...], preferred_element_type=jnp.float32) + b1_ref[...]
    h = jnp.maximum(h, 0.0)
    # fc2 (16 -> 1): VPU multiply + XLU lane-reduce instead of an N=1 MXU
    # matmul (avoids a wasted, 1-of-256-column MXU push/pop).
    out = jnp.sum(h * w2r_ref[...], axis=-1, keepdims=True) + b2_ref[...]
    out_ref[...] = out.astype(out_ref.dtype)


def _pick_batch_tile(B, S):
    """Choose the batch tile TM.

    * Target >= ~512 KiB of *real* x traffic per step (S*4 bytes/row) so the
      ~0.35 us per-grid-step overhead is amortized.
    * Clamp by the lane-PADDED VMEM footprint: each (TM, S) x buffer and each
      (TM, 1) out buffer costs TM * round_up(S,128|1->128) * 4 B in VMEM; both
      are double-buffered.  Budget <= 24 MiB -> safe per TensorCore on v7x
      (64 MiB physical), and well under v5e/v6e's 128 MiB when the scoped
      limit is raised explicitly.
    * Never exceed the (sublane-rounded) batch; keep >= 2 tiles for large
      batches so megacore (v7x) can split them across TensorCores.
    """
    target_bytes = 512 * 1024
    tm = _round_up(max(target_bytes // (S * 4), _SUBLANE), _SUBLANE)

    per_row_padded_bytes = (_round_up(S, _LANE) + _LANE) * 4   # x + out, 1 buffer each
    vmem_budget = 24 * 1024 * 1024                              # double-buffered data blocks
    tm_vmem_cap = _round_down(vmem_budget // (2 * per_row_padded_bytes), _SUBLANE)
    tm = min(tm, max(tm_vmem_cap, _SUBLANE))

    tm = min(tm, _round_up(B, _SUBLANE))

    # Keep >= 2 tiles for big batches so ("parallel",) uses both v7x TCs.
    if B >= 2048 and pl.cdiv(B, tm) < 2:
        tm = _round_up(pl.cdiv(B, 2), _SUBLANE)
    return tm


def critic_forward(x, w1, b1, w2, b2):
    """x: (B, S). w1: (S, 16), b1: (1, 16), w2: (16, 1), b2: (1, 1).

    Returns (B, 1) float32.
    """
    B, S = x.shape
    H = w1.shape[1]

    # fc2 weight as a row so the kernel can use a broadcasted VPU multiply.
    w2_row = w2.reshape(1, H).astype(w1.dtype)
    b2 = b2.reshape(1, 1)

    tm = _pick_batch_tile(B, S)
    grid = (pl.cdiv(B, tm),)   # ragged last block: OOB out rows are masked

    # VMEM footprint per step (lane-PADDED, double-buffered x + out; weights
    # are tiny and resident):
    #   2 * tm * round_up(S,128) * 4  (x)  +  2 * tm * 128 * 4  (out)
    # plus ~2 MiB headroom for resident weights / Mosaic internal scratch.
    data_block_bytes = tm * (_round_up(S, _LANE) + _LANE) * 4
    vmem_limit = max(4 * 1024 * 1024, 2 * data_block_bytes + (2 << 20))

    out = pl.pallas_call(
        _critic_kernel,
        out_shape=jax.ShapeDtypeStruct((B, 1), jnp.float32),
        grid=grid,
        in_specs=[
            pl.BlockSpec((tm, S), lambda i: (i, 0)),   # x: tiled over batch
            pl.BlockSpec((S, H), lambda i: (0, 0)),    # w1: resident
            pl.BlockSpec((1, H), lambda i: (0, 0)),    # b1: resident
            pl.BlockSpec((1, H), lambda i: (0, 0)),    # w2 (row): resident
            pl.BlockSpec((1, 1), lambda i: (0, 0)),    # b2: resident
        ],
        out_specs=pl.BlockSpec((tm, 1), lambda i: (i, 0)),
        compiler_params=pltpu.CompilerParams(
            # Batch tiles are independent -> shard across TCs on v7x megacore.
            dimension_semantics=("parallel",),
            vmem_limit_bytes=int(vmem_limit),
        ),
    )(x, w1, b1, w2_row, b2)
    return out


def init_critic_params(key, state_size, hidden=16):
    """Deterministic init mimicking torch.nn.Linear (uniform +/- 1/sqrt(fan_in))."""
    k1, k2, k3, k4 = jax.random.split(key, 4)
    bound1 = 1.0 / jnp.sqrt(state_size)
    bound2 = 1.0 / jnp.sqrt(hidden)
    w1 = jax.random.uniform(k1, (state_size, hidden), jnp.float32, -bound1, bound1)
    b1 = jax.random.uniform(k2, (1, hidden), jnp.float32, -bound1, bound1)
    w2 = jax.random.uniform(k3, (hidden, 1), jnp.float32, -bound2, bound2)
    b2 = jax.random.uniform(k4, (1, 1), jnp.float32, -bound2, bound2)
    return w1, b1, w2, b2


if __name__ == "__main__":
    key = jax.random.PRNGKey(0)
    kx, kp, kx2 = jax.random.split(key, 3)

    state_size = 8
    w1, b1, w2, b2 = init_critic_params(kp, state_size)

    def ref_fn(x):
        return jnp.maximum(x @ w1 + b1, 0.0) @ w2 + b2

    # Small shape consistent with the module (batch=2, state_size=8).
    x_small = jax.random.normal(kx, (2, state_size), dtype=jnp.float32)
    out_small = jax.block_until_ready(critic_forward(x_small, w1, b1, w2, b2))
    assert out_small.shape == (2, 1)
    assert jnp.allclose(out_small, ref_fn(x_small), atol=1e-5), (out_small, ref_fn(x_small))

    # Larger, non-divisible batch to exercise the tiled, ragged, pipelined
    # path (grid = 2, masked last block, no padding copy of x).
    x_big = jax.random.normal(kx2, (2050, state_size), dtype=jnp.float32)
    out_big = jax.block_until_ready(critic_forward(x_big, w1, b1, w2, b2))
    assert out_big.shape == (2050, 1)
    assert jnp.allclose(out_big, ref_fn(x_big), atol=1e-5)

    print("KERNEL_OK")
</pallas_src>

<mosaic_0001>
module attributes {stable_mosaic.version = 11 : i64} {
  func.func @_critic_kernel(%arg0: i32, %arg1: memref<8x8xf32, #tpu.memory_space<vmem>>, %arg2: memref<8x16xf32, #tpu.memory_space<vmem>>, %arg3: memref<1x16xf32, #tpu.memory_space<vmem>>, %arg4: memref<1x16xf32, #tpu.memory_space<vmem>>, %arg5: memref<1x1xf32, #tpu.memory_space<vmem>>, %arg6: memref<8x1xf32, #tpu.memory_space<vmem>>) attributes {dimension_semantics = [#tpu.dimension_semantics<parallel>], iteration_bounds = array<i64: 1>, scalar_prefetch = 0 : i64, scratch_operands = 0 : i64, tpu.core_type = #tpu.core_type<tc>, window_params = [{transform_indices = @transform_0, window_bounds = array<i64: 8, 8>}, {pipeline_mode = #tpu.pipeline_mode<synchronous>, transform_indices = @transform_1, window_bounds = array<i64: 8, 16>}, {pipeline_mode = #tpu.pipeline_mode<synchronous>, transform_indices = @transform_2, window_bounds = array<i64: 1, 16>}, {pipeline_mode = #tpu.pipeline_mode<synchronous>, transform_indices = @transform_3, window_bounds = array<i64: 1, 16>}, {pipeline_mode = #tpu.pipeline_mode<synchronous>, transform_indices = @transform_4, window_bounds = array<i64: 1, 1>}, {transform_indices = @transform_5, window_bounds = array<i64: 8, 1>}]} {
    %c0 = arith.constant 0 : index
    %c0_0 = arith.constant 0 : index
    %0 = vector.load %arg1[%c0, %c0_0] : memref<8x8xf32, #tpu.memory_space<vmem>>, vector<8x8xf32>
    %c0_1 = arith.constant 0 : index
    %c0_2 = arith.constant 0 : index
    %1 = vector.load %arg2[%c0_1, %c0_2] : memref<8x16xf32, #tpu.memory_space<vmem>>, vector<8x16xf32>
    %cst = arith.constant dense<0.000000e+00> : vector<8x16xf32>
    %2 = tpu.matmul %0, %1, %cst {dimension_numbers = #tpu.dot_dimension_numbers<[1], [0], [0], [1], [0, 0, 1, 1], [], []>} : vector<8x8xf32>, vector<8x16xf32>, vector<8x16xf32> -> vector<8x16xf32>
    %c0_3 = arith.constant 0 : index
    %c0_4 = arith.constant 0 : index
    %3 = vector.load %arg3[%c0_3, %c0_4] : memref<1x16xf32, #tpu.memory_space<vmem>>, vector<1x16xf32>
    %4 = vector.broadcast %3 : vector<1x16xf32> to vector<8x16xf32>
    %5 = arith.addf %2, %4 : vector<8x16xf32>
    %cst_5 = arith.constant 0.000000e+00 : f32
    %6 = vector.broadcast %cst_5 : f32 to vector<8x16xf32>
    %7 = arith.maximumf %5, %6 : vector<8x16xf32>
    %c0_6 = arith.constant 0 : index
    %c0_7 = arith.constant 0 : index
    %8 = vector.load %arg4[%c0_6, %c0_7] : memref<1x16xf32, #tpu.memory_space<vmem>>, vector<1x16xf32>
    %9 = vector.broadcast %8 : vector<1x16xf32> to vector<8x16xf32>
    %10 = arith.mulf %7, %9 : vector<8x16xf32>
    %cst_8 = arith.constant dense<0.000000e+00> : vector<8xf32>
    %11 = vector.multi_reduction <add>, %10, %cst_8 [1] : vector<8x16xf32> to vector<8xf32>
    %12 = vector.shape_cast %11 : vector<8xf32> to vector<8x1xf32>
    %c0_9 = arith.constant 0 : index
    %c0_10 = arith.constant 0 : index
    %13 = vector.load %arg5[%c0_9, %c0_10] : memref<1x1xf32, #tpu.memory_space<vmem>>, vector<1x1xf32>
    %14 = vector.broadcast %13 : vector<1x1xf32> to vector<8x1xf32>
    %15 = arith.addf %12, %14 : vector<8x1xf32>
    %c0_11 = arith.constant 0 : index
    %c0_12 = arith.constant 0 : index
    %16 = vector.load %arg6[%c0_11, %c0_12] : memref<8x1xf32, #tpu.memory_space<vmem>>, vector<8x1xf32>
    tpu.vector_store %arg6[%c0_11, %c0_12], %15 {strides = array<i32>} : memref<8x1xf32, #tpu.memory_space<vmem>>, vector<8x1xf32>,
    return
  }
  func.func @transform_0(%arg0: i32) -> (i32, i32) {
    %c0_i32 = arith.constant 0 : i32
    %c0_i32_0 = arith.constant 0 : i32
    return %arg0, %c0_i32 : i32, i32
  }
  func.func @transform_1(%arg0: i32) -> (i32, i32) {
    %c0_i32 = arith.constant 0 : i32
    %c0_i32_0 = arith.constant 0 : i32
    %c0_i32_1 = arith.constant 0 : i32
    return %c0_i32, %c0_i32_0 : i32, i32
  }
  func.func @transform_2(%arg0: i32) -> (i32, i32) {
    %c0_i32 = arith.constant 0 : i32
    %c0_i32_0 = arith.constant 0 : i32
    %c0_i32_1 = arith.constant 0 : i32
    return %c0_i32, %c0_i32_0 : i32, i32
  }
  func.func @transform_3(%arg0: i32) -> (i32, i32) {
    %c0_i32 = arith.constant 0 : i32
    %c0_i32_0 = arith.constant 0 : i32
    %c0_i32_1 = arith.constant 0 : i32
    return %c0_i32, %c0_i32_0 : i32, i32
  }
  func.func @transform_4(%arg0: i32) -> (i32, i32) {
    %c0_i32 = arith.constant 0 : i32
    %c0_i32_0 = arith.constant 0 : i32
    %c0_i32_1 = arith.constant 0 : i32
    return %c0_i32, %c0_i32_0 : i32, i32
  }
  func.func @transform_5(%arg0: i32) -> (i32, i32) {
    %c0_i32 = arith.constant 0 : i32
    %c0_i32_0 = arith.constant 0 : i32
    return %arg0, %c0_i32 : i32, i32
  }
}

</mosaic_0001>

<llo_original>
// kernel: tpu_custom_call.1
$region0: #{tpu_custom_call.1}
  #allocation0 [shape = 'u32[]', space=smem, size = 0x4, offset = 0x4, fixed_abs, tag = 'smem constant byte address 0x4 - core index']
  #allocation1 [shape = 'u32[144,128]{1,0:T(1,128)}', space=vmem, size = 0x12000, scoped, tag = 'internal scratch']
  #allocation2 [shape = 'f32[1,1]{1,0:T(1,128)S(1)}', space=vmem, size = 0x200, scoped, tag = 'scoped memory for tpu_custom_call.1']
  %s0 = inlined_call_operand.vmem [shape: f32[2,8], index: 0, kind: input, shape index: {}]
  %s1 = inlined_call_operand.hbm [shape: f32[8,16], index: 1, kind: input, shape index: {}]
  %s2 = inlined_call_operand.vmem [shape: f32[1,16], index: 2, kind: input, shape index: {}]
  %s3 = inlined_call_operand.vmem [shape: f32[1,16], index: 3, kind: input, shape index: {}]
  %s4 = inlined_call_operand.<no memory space> [shape: f32[1,1], index: 4, kind: input, shape index: {}]
  %s5 = inlined_call_operand.vmem [shape: f32[2,1], index: 5, kind: output, shape index: {}]
  %s6 = sld [smem:[#allocation0]]
  $region64: #{tpu_custom_call.1} parent=0
    _
  %s8 = ssub.s32 1, %s6
  %s9 = scalar_select 0, %s8, %s6
  %v10 = vstv %s4
  %11 = vst [vmem:[#allocation2] sm:$0x1] %v10
  $region1: #{tpu_custom_call.1} parent=0
    #allocation3 [shape = 'u8[4096]{0}', space=vmem, size = 0x1000, scoped, tag = 'input window, operand 1, single buffered']
    #allocation4 [shape = 's32[1]{0}', space=sflag, size = 0x4, scoped, tag = 'scoped memory for tpu_custom_call.1']
    #allocation5 [shape = 'u8[4096]{0}', space=vmem, size = 0x1000, scoped, tag = 'output window, operand 0, single buffered']
    %12 = vsyncpa [#allocation4], 0
    // Predicated region
    $region2: #{tpu_custom_call.1} parent=1 // pred_check
      _
    $region3: #{tpu_custom_call.1} parent=1 // pred_check_branch
      %14 = sbr.rel (0) target = $region5
    $region4: #{tpu_custom_call.1} parent=1 // pred_region
      _
    $region5: #{tpu_custom_call.1} parent=1 // pred_fallthru
      _
    // Predicated region
    $region6: #{tpu_custom_call.1} parent=1 // pred_check
      _
    $region7: #{tpu_custom_call.1} parent=1 // pred_check_branch
      %16 = sbr.rel (0) target = $region9
    $region8: #{tpu_custom_call.1} parent=1 // pred_region
      %s18 = ssub.s32 128, 128
      %19 = vsyncadd [#allocation4], %s18
      %s21 = sshll.u32 [#allocation3], 4
      %s22 = int_to_ptr.vmem [resolvable:$true] %s21
      %24 = dma.hbm_to_vmem [thread:$0]  %s1, 128, %s22, [#allocation4]
    $region9: #{tpu_custom_call.1} parent=1 // pred_fallthru
      _
    // Predicated region
    $region10: #{tpu_custom_call.1} parent=1 // pred_check
      _
    $region11: #{tpu_custom_call.1} parent=1 // pred_check_branch
      %26 = sbr.rel (0) target = $region13
    $region12: #{tpu_custom_call.1} parent=1 // pred_region
      _
    $region13: #{tpu_custom_call.1} parent=1 // pred_fallthru
      _
    // Predicated region
    $region14: #{tpu_custom_call.1} parent=1 // pred_check
      _
    $region15: #{tpu_custom_call.1} parent=1 // pred_check_branch
      %28 = sbr.rel (0) target = $region17
    $region16: #{tpu_custom_call.1} parent=1 // pred_region
      _
    $region17: #{tpu_custom_call.1} parent=1 // pred_fallthru
      _
    // Predicated region
    $region18: #{tpu_custom_call.1} parent=1 // pred_check
      _
    $region19: #{tpu_custom_call.1} parent=1 // pred_check_branch
      %30 = sbr.rel (0) target = $region21
    $region20: #{tpu_custom_call.1} parent=1 // pred_region
      _
    $region21: #{tpu_custom_call.1} parent=1 // pred_fallthru
      _
    // Predicated region
    $region22: #{tpu_custom_call.1} parent=1 // pred_check
      _
    $region23: #{tpu_custom_call.1} parent=1 // pred_check_branch
      %32 = sbr.rel (0) target = $region25
    $region24: #{tpu_custom_call.1} parent=1 // pred_region
      %33 = dma.done [#allocation4], 128
    $region25: #{tpu_custom_call.1} parent=1 // pred_fallthru
      _
    %v34 = vld [vmem:[%s0] sm:$0xff]
    %v35 = vld [vmem:[#allocation3] sm:$0xff]
    %v36 = vld [vmem:[%s2] sm:$0x1]
    %v38 = vlaneseq
    %v39 = vshrl.u32 %v38, 7
    %v40 = vsub.s32 0, %v39
    %v41 = vrot.slane %v36, %v40
    %vm43 = vcmask 64512
    %v45 = vsel %vm43, %v34, 0
    %47 = vmatprep.subr.mxu0 0.0
    %48 = vmatpush1.msra.mxu0 %v35
    %49 = vmatprep.subr.mxu0 0.0
    %50 = vmatpush1.msra.mxu0 0.0
    %51 = vmatprep.subr.mxu0 0.0
    %52 = vmatpush1.msra.mxu0 0.0
    %53 = vmatprep.subr.mxu0 0.0
    %54 = vmatpush1.msra.mxu0 0.0
    %55 = vmatprep.subr.mxu0 0.0
    %56 = vmatpush1.msra.mxu0 0.0
    %57 = vmatprep.subr.mxu0 0.0
    %58 = vmatpush1.msra.mxu0 0.0
    %59 = vmatprep.subr.mxu0 0.0
    %60 = vmatpush1.msra.mxu0 0.0
    %61 = vmatprep.subr.mxu0 0.0
    %62 = vmatpush1.msra.mxu0 0.0
    %63 = vmatprep.subr.mxu0 0.0
    %64 = vmatpush1.msra.mxu0 0.0
    %65 = vmatprep.subr.mxu0 0.0
    %66 = vmatpush1.msra.mxu0 0.0
    %67 = vmatprep.subr.mxu0 0.0
    %68 = vmatpush1.msra.mxu0 0.0
    %69 = vmatprep.subr.mxu0 0.0
    %70 = vmatpush1.msra.mxu0 0.0
    %71 = vmatprep.subr.mxu0 0.0
    %72 = vmatpush1.msra.mxu0 0.0
    %73 = vmatprep.subr.mxu0 0.0
    %74 = vmatpush1.msra.mxu0 0.0
    %75 = vmatprep.subr.mxu0 0.0
    %76 = vmatpush1.msra.mxu0 0.0
    %77 = vmatprep.subr.mxu0 0.0
    %78 = vmatpush1.msra.mxu0 0.0
    %79 = vmatprep.subr.mxu0 0.0
    %80 = vmatpush1.msra.mxu0 0.0
    %81 = vmatprep.subr.mxu0 0.0
    %82 = vmatpush1.msra.mxu0 0.0
    %83 = vmatprep.subr.mxu0 0.0
    %84 = vmatpush1.msra.mxu0 0.0
    %85 = vmatprep.subr.mxu0 0.0
    %86 = vmatpush1.msra.mxu0 0.0
    %87 = vmatprep.subr.mxu0 0.0
    %88 = vmatpush1.msra.mxu0 0.0
    %89 = vmatprep.subr.mxu0 0.0
    %90 = vmatpush1.msra.mxu0 0.0
    %91 = vmatprep.subr.mxu0 0.0
    %92 = vmatpush1.msra.mxu0 0.0
    %93 = vmatprep.subr.mxu0 0.0
    %94 = vmatpush1.msra.mxu0 0.0
    %95 = vmatprep.subr.mxu0 0.0
    %96 = vmatpush1.msra.mxu0 0.0
    %97 = vmatprep.subr.mxu0 0.0
    %98 = vmatpush1.msra.mxu0 0.0
    %99 = vmatprep.subr.mxu0 0.0
    %100 = vmatpush1.msra.mxu0 0.0
    %101 = vmatprep.subr.mxu0 0.0
    %102 = vmatpush1.msra.mxu0 0.0
    %103 = vmatprep.subr.mxu0 0.0
    %104 = vmatpush1.msra.mxu0 0.0
    %105 = vmatprep.subr.mxu0 0.0
    %106 = vmatpush1.msra.mxu0 0.0
    %107 = vmatprep.subr.mxu0 0.0
    %108 = vmatpush1.msra.mxu0 0.0
    %109 = vmatprep.subr.mxu0 0.0
    %110 = vmatpush1.msra.mxu0 0.0
    %111 = vmatprep.mubr.f32.mxu0 0.0
    %112 = vmatmul.mubr.f32.gmra.mrb[0].mxu0 %v45
    %v113 = vpop.f32.mrb[0].mxu0
    %v114 = vadd.f32 %v41, %v113
    %v115 = vpop.f32.mrb[0].mxu0
    %116 = vdwg.mxu0
    %v117 = vmax.f32 %v114, 0.0
    %v118 = vld [vmem:[%s3] sm:$0x1]
    %v120 = vlaneseq
    %v121 = vshrl.u32 %v120, 7
    %v122 = vsub.s32 0, %v121
    %v123 = vrot.slane %v118, %v122
    %v125 = vmul.f32 %v117, %v123
    %vm126 = vcmask 130048
    %v127 = vsel %vm126, %v125, 0.0
    %128 = vadd.xlane.f32.xlu0 %v127
    %v129 = vpop.xlane.xlu0 %128
    %v130 = vld [vmem:[#allocation2] sm:$0x1]
    %v132 = vlaneseq
    %v133 = vshrl.u32 %v132, 7
    %v134 = vsub.s32 0, %v133
    %v135 = vrot.slane %v130, %v134
    %v137 = vadd.f32 %v129, %v135
    %vm138 = vcmask 7168
    %139 = vst.msk [vmem:[#allocation5] sm:$0xff] %vm138, %v137
    // Predicated region
    $region26: #{tpu_custom_call.1} parent=1 // pred_check
      _
    $region27: #{tpu_custom_call.1} parent=1 // pred_check_branch
      %141 = sbr.rel (0) target = $region29
    $region28: #{tpu_custom_call.1} parent=1 // pred_region
      // Predicated region
      $region30: #{tpu_custom_call.1} parent=28 // pred_check
        _
      $region31: #{tpu_custom_call.1} parent=28 // pred_check_branch
        %143 = sbr.rel (0) target = $region33
      $region32: #{tpu_custom_call.1} parent=28 // pred_region
        // Predicated region
        $region34: #{tpu_custom_call.1} parent=32 // pred_check
          _
        $region35: #{tpu_custom_call.1} parent=32 // pred_check_branch
          %145 = sbr.rel target = $region37
        $region36: #{tpu_custom_call.1} parent=32 // pred_region
          // Predicated region
          $region49: #{tpu_custom_call.1} parent=36 // pred_check
            _
          $region50: #{tpu_custom_call.1} parent=36 // pred_check_branch
            %160 = sbr.rel (0) target = $region52
          $region51: #{tpu_custom_call.1} parent=36 // pred_region
            loop: start=0, step=1, limit=1
            $region53: #{tpu_custom_call.1} parent=51 // loop_pre_header
              _
            $region54: #{tpu_custom_call.1} parent=51 // loop_header
              %s163 = sphi 0, %s167
              %p164 = scmp.ge.s32.totalorder %s163, 1
              %s168 = sphi [#allocation5], [#allocation5]
              %s169 = sphi %s5, %s5
            $region55: #{tpu_custom_call.1} parent=51 // loop_header_branch
              %166 = sbr.rel (%p164) target = $region59
            $region56: #{tpu_custom_call.1} parent=51 // loop_body
              %v170 = vld [vmem:[%s168] sm:$0x3]
              %171 = vst [vmem:[%s169] sm:$0x3] %v170
            $region57: #{tpu_custom_call.1} parent=51 // loop_footer
              %s167 = sadd.s32 1, %s163
            $region58: #{tpu_custom_call.1} parent=51 // loop_footer_branch
              %162 = sbr.rel target = $region54
            $region59: #{tpu_custom_call.1} parent=51 // loop_exit
              _
          $region52: #{tpu_custom_call.1} parent=36 // pred_fallthru
            _
        $region37: #{tpu_custom_call.1} parent=32 // pred_fallthru
          _
        // Predicated region
        $region38: #{tpu_custom_call.1} parent=32 // pred_check
          _
        $region39: #{tpu_custom_call.1} parent=32 // pred_check_branch
          %147 = sbr.rel (0) target = $region41
        $region40: #{tpu_custom_call.1} parent=32 // pred_region
          loop: start=0, step=1, limit=1
          $region42: #{tpu_custom_call.1} parent=40 // loop_pre_header
            _
          $region43: #{tpu_custom_call.1} parent=40 // loop_header
            %s150 = sphi 0, %s154
            %p151 = scmp.ge.s32.totalorder %s150, 1
            %s155 = sphi [#allocation5], [#allocation5]
            %s156 = sphi %s5, %s5
          $region44: #{tpu_custom_call.1} parent=40 // loop_header_branch
            %153 = sbr.rel (%p151) target = $region48
          $region45: #{tpu_custom_call.1} parent=40 // loop_body
            %v157 = vld [vmem:[%s155] sm:$0x3]
            %158 = vst [vmem:[%s156] sm:$0x3] %v157
          $region46: #{tpu_custom_call.1} parent=40 // loop_footer
            %s154 = sadd.s32 1, %s150
          $region47: #{tpu_custom_call.1} parent=40 // loop_footer_branch
            %149 = sbr.rel target = $region43
          $region48: #{tpu_custom_call.1} parent=40 // loop_exit
            _
        $region41: #{tpu_custom_call.1} parent=32 // pred_fallthru
          _
      $region33: #{tpu_custom_call.1} parent=28 // pred_fallthru
        _
      %172 = vnop
    $region29: #{tpu_custom_call.1} parent=1 // pred_fallthru
      _
    // Predicated region
    $region60: #{tpu_custom_call.1} parent=1 // pred_check
      _
    $region61: #{tpu_custom_call.1} parent=1 // pred_check_branch
      %174 = sbr.rel (0) target = $region63
    $region62: #{tpu_custom_call.1} parent=1 // pred_region
      _
    $region63: #{tpu_custom_call.1} parent=1 // pred_fallthru
      _
    %175 = vsyncpa [#allocation4], 1

</llo_original>
